<compile_context>
chip_gen: v5e
topology: v5e:2x2
jax: 0.10.0
libtpu: 0.0.40
codegen_flags: <defaults>
</compile_context>

<pallas_src>
import functools

import numpy as np
import jax
import jax.numpy as jnp
from jax import lax
from jax.experimental import pallas as pl
from jax.experimental.pallas import tpu as pltpu

EPS = 1e-5


def _round_up(x, m):
    return ((x + m - 1) // m) * m


def _bn_train(y, gb):
    """Training-mode BatchNorm over the packed batch*spatial lane axis.

    y:  (C, N*S) activations.
    gb: (C, 2)   column 0 = gamma, column 1 = beta.
    Two-pass (mean, then centered second moment): biased variance, eps=1e-5.
    """
    mean = jnp.mean(y, axis=1, keepdims=True)
    var = jnp.mean((y - mean) * (y - mean), axis=1, keepdims=True)
    scale = gb[:, 0:1] * lax.rsqrt(var + EPS)
    return y * scale + (gb[:, 1:2] - mean * scale)


# ------------------------------- the kernel ---------------------------------

def _res_bottleneck_kernel(*refs, N, H, W, stride, has_down):
    (x_ref, w1_ref, w2_ref, w3_ref, masks_ref,
     gb1_ref, gb2_ref, gb3_ref) = refs[:8]
    rest = list(refs[8:])
    sel_ref = rest.pop(0) if stride > 1 else None
    if has_down:
        wd_ref = rest.pop(0)
        gbd_ref = rest.pop(0)
    o_ref = rest.pop(0)

    HW = H * W
    NHW = N * HW

    x = x_ref[...]                                                  # (Cin, N*HW)

    # ---- conv1 (1x1) + BN1 + ReLU -------------------------------------------
    y1 = jnp.dot(w1_ref[...], x, preferred_element_type=jnp.float32)  # (mid_p, NHW)
    h1 = jnp.maximum(_bn_train(y1, gb1_ref[...]), 0.0)

    # ---- conv2 (3x3, pad 1, stride) + BN2 + ReLU -----------------------------
    # Tap-fold: build the 9 shifted & masked slabs (each exactly one sublane
    # tile tall thanks to mid_p % 8 == 0) and contract ONCE with K = 9*mid_p.
    slabs = []
    for ky in range(3):
        for kx in range(3):
            t = ky * 3 + kx
            sh = (ky - 1) * W + (kx - 1)                   # flattened spatial shift
            hs = h1 if sh == 0 else pltpu.roll(h1, shift=(-sh) % NHW, axis=1)
            slabs.append(hs * masks_ref[t])                # (mid_p, NHW) * (1, NHW)
    stacked = jnp.concatenate(slabs, axis=0)               # (9*mid_p, NHW), aligned
    y2 = jnp.dot(w2_ref[...], stacked, preferred_element_type=jnp.float32)
    if sel_ref is not None:
        # stride-2 subsampling via a constant 0/1 selection matmul (keeps the
        # lane axis dense; no strided gathers).
        y2 = jnp.dot(y2, sel_ref[...], preferred_element_type=jnp.float32)
    h2 = jnp.maximum(_bn_train(y2, gb2_ref[...]), 0.0)     # (mid_p, N*HoWo)

    # ---- conv3 (1x1) + BN3 ----------------------------------------------------
    y3 = _bn_train(jnp.dot(w3_ref[...], h2, preferred_element_type=jnp.float32),
                   gb3_ref[...])                            # (Cout, N*HoWo)

    # ---- skip path ------------------------------------------------------------
    if has_down:
        xs = x
        if sel_ref is not None:
            xs = jnp.dot(xs, sel_ref[...], preferred_element_type=jnp.float32)
        skip = _bn_train(jnp.dot(wd_ref[...], xs, preferred_element_type=jnp.float32),
                         gbd_ref[...])
    else:
        skip = x                                            # identity (Cin == Cout)

    o_ref[...] = jnp.maximum(y3 + skip, 0.0)


# ------------------------------ wrapper / glue -------------------------------

def res_bottleneck_forward(x_nchw, p, stride, in_channels, out_channels):
    N, Cin, H, W = x_nchw.shape
    mid = out_channels // 4
    mid_p = _round_up(max(mid, 8), 8)        # sublane-tile aligned middle width
    HW = H * W
    NHW = N * HW
    Ho = (H - 1) // stride + 1
    Wo = (W - 1) // stride + 1
    HoWo = Ho * Wo
    NHoWo = N * HoWo
    has_down = (stride != 1) or (in_channels != out_channels)

    # NCHW -> channels-major, batch packed on the lane axis: (Cin, N*H*W).
    # One tiny XLA transpose at the boundary buys >=128-lane stores inside.
    x_slab = jnp.transpose(x_nchw.reshape(N, Cin, HW), (1, 0, 2)) \
                .reshape(Cin, NHW).astype(jnp.float32)

    # ----------------- host-side constant packing (all tiny) -----------------
    # conv1: (Cin, mid) -> (mid_p, Cin), zero-padded output rows.
    w1_t = jnp.zeros((mid_p, Cin), jnp.float32).at[:mid, :].set(jnp.transpose(p['w1']))

    # conv2 HWIO (3,3,mid,mid) -> packed (mid_p, 9*mid_p); column index t*mid_p + i.
    w2_toi = jnp.transpose(p['w2'].reshape(9, mid, mid), (2, 0, 1))    # (out, tap, in)
    w2_toi = jnp.pad(w2_toi, ((0, mid_p - mid), (0, 0), (0, mid_p - mid)))
    w2p = w2_toi.reshape(mid_p, 9 * mid_p)

    # conv3: (mid, Cout) -> (Cout, mid_p), zero-padded input columns.
    w3_t = jnp.zeros((out_channels, mid_p), jnp.float32).at[:, :mid].set(
        jnp.transpose(p['w3']))

    # 9 per-tap zero-padding masks for the packed (image-major) lane axis;
    # per-image validity from lane % (H*W) so roll wraparound is masked.
    lane = np.arange(NHW)
    pos = lane % HW
    row, col = pos // W, pos % W
    masks_np = np.zeros((9, 1, NHW), np.float32)
    for ky in range(3):
        for kx in range(3):
            dy, dx = ky - 1, kx - 1
            ok = ((row + dy >= 0) & (row + dy < H) &
                  (col + dx >= 0) & (col + dx < W))
            masks_np[ky * 3 + kx, 0] = ok.astype(np.float32)
    masks = jnp.asarray(masks_np)

    def pack_gb(g, b, c):
        gb = jnp.zeros((c, 2), jnp.float32)
        gb = gb.at[:g.size, 0].set(g.reshape(-1))
        gb = gb.at[:b.size, 1].set(b.reshape(-1))
        return gb

    gb1 = pack_gb(p['g1'], p['bt1'], mid_p)
    gb2 = pack_gb(p['g2'], p['bt2'], mid_p)
    gb3 = pack_gb(p['g3'], p['bt3'], out_channels)

    in_arrays = [x_slab, w1_t, w2p, w3_t, masks, gb1, gb2, gb3]
    if stride > 1:
        # (NHW, N*HoWo) 0/1 selection matrix for stride-s spatial subsampling.
        out_lane = np.arange(NHoWo)
        img, q = out_lane // HoWo, out_lane % HoWo
        src = img * HW + (q // Wo) * stride * W + (q % Wo) * stride
        sel_np = np.zeros((NHW, NHoWo), np.float32)
        sel_np[src, out_lane] = 1.0
        in_arrays.append(jnp.asarray(sel_np))
    if has_down:
        wd_t = jnp.transpose(p['wd'])                       # (Cout, Cin)
        gbd = pack_gb(p['gd'], p['btd'], out_channels)
        in_arrays += [wd_t, gbd]

    def full_spec(a):
        nd = a.ndim
        return pl.BlockSpec(a.shape, lambda i, _n=nd: (0,) * _n)

    kern = functools.partial(_res_bottleneck_kernel,
                             N=N, H=H, W=W, stride=stride, has_down=has_down)

    out_slab = pl.pallas_call(
        kern,
        grid=(1,),
        in_specs=[full_spec(a) for a in in_arrays],
        out_specs=pl.BlockSpec((out_channels, NHoWo), lambda i: (0, 0)),
        out_shape=jax.ShapeDtypeStruct((out_channels, NHoWo), jnp.float32),
        compiler_params=pltpu.CompilerParams(
            dimension_semantics=("arbitrary",),
            # Whole-batch working set here is ~1 MiB; 32 MiB cap is safe on
            # v5e/v6e (128 MiB VMEM) and v7x (64 MiB VMEM) alike.
            vmem_limit_bytes=32 * 1024 * 1024,
        ),
    )(*in_arrays)

    # (Cout, N*HoWo) -> NCHW: one tiny XLA transpose at the exit boundary only.
    out = jnp.transpose(out_slab.reshape(out_channels, N, HoWo), (1, 0, 2))
    return out.reshape(N, out_channels, Ho, Wo)


# ------------------------------- parameters ----------------------------------

def init_params(key, in_channels, out_channels, stride):
    """Deterministic PyTorch-like init (uniform +-1/sqrt(fan_in); BN gamma=1, beta=0)."""
    mid = out_channels // 4
    ks = jax.random.split(key, 8)

    def u(k, shape, fan_in):
        bound = 1.0 / np.sqrt(fan_in)
        return jax.random.uniform(k, shape, jnp.float32, -bound, bound)

    p = {
        'w1': u(ks[0], (in_channels, mid), in_channels),
        'b1': u(ks[1], (1, mid), in_channels),
        'g1': jnp.ones((1, mid), jnp.float32), 'bt1': jnp.zeros((1, mid), jnp.float32),
        'w2': u(ks[2], (3, 3, mid, mid), 9 * mid),           # HWIO
        'b2': u(ks[3], (1, mid), 9 * mid),
        'g2': jnp.ones((1, mid), jnp.float32), 'bt2': jnp.zeros((1, mid), jnp.float32),
        'w3': u(ks[4], (mid, out_channels), mid),
        'b3': u(ks[5], (1, out_channels), mid),
        'g3': jnp.ones((1, out_channels), jnp.float32),
        'bt3': jnp.zeros((1, out_channels), jnp.float32),
    }
    if stride != 1 or in_channels != out_channels:
        p.update({
            'wd': u(ks[6], (in_channels, out_channels), in_channels),
            'bd': u(ks[7], (1, out_channels), in_channels),
            'gd': jnp.ones((1, out_channels), jnp.float32),
            'btd': jnp.zeros((1, out_channels), jnp.float32),
        })
    return p


# ---------------------------- pure-JAX reference -----------------------------

def reference_forward(x_nchw, p, stride, in_channels, out_channels):
    mid = out_channels // 4
    x = jnp.transpose(x_nchw, (0, 2, 3, 1)).astype(jnp.float32)

    def bn(y, g, b):
        mean = jnp.mean(y, axis=(0, 1, 2), keepdims=True)
        var = jnp.mean((y - mean) ** 2, axis=(0, 1, 2), keepdims=True)
        return (y - mean) / jnp.sqrt(var + EPS) * g.reshape(1, 1, 1, -1) + b.reshape(1, 1, 1, -1)

    def conv(y, w4, b, s, pad):
        return lax.conv_general_dilated(
            y, w4, (s, s), [(pad, pad), (pad, pad)],
            dimension_numbers=('NHWC', 'HWIO', 'NHWC')) + b.reshape(1, 1, 1, -1)

    h = jnp.maximum(bn(conv(x, p['w1'].reshape(1, 1, in_channels, mid), p['b1'], 1, 0),
                       p['g1'], p['bt1']), 0.0)
    h = jnp.maximum(bn(conv(h, p['w2'], p['b2'], stride, 1), p['g2'], p['bt2']), 0.0)
    h = bn(conv(h, p['w3'].reshape(1, 1, mid, out_channels), p['b3'], 1, 0), p['g3'], p['bt3'])
    if stride != 1 or in_channels != out_channels:
        s = bn(conv(x, p['wd'].reshape(1, 1, in_channels, out_channels), p['bd'], stride, 0),
               p['gd'], p['btd'])
    else:
        s = x
    return jnp.transpose(jnp.maximum(h + s, 0.0), (0, 3, 1, 2))


# ------------------------------------ main ------------------------------------

def run_case(key, N, Cin, H, W, Cout, stride):
    kx, kp = jax.random.split(key)
    x = jax.random.normal(kx, (N, Cin, H, W), jnp.float32)
    p = init_params(kp, Cin, Cout, stride)
    fwd = jax.jit(functools.partial(res_bottleneck_forward, stride=stride,
                                    in_channels=Cin, out_channels=Cout))
    out = jax.block_until_ready(fwd(x, p))
    Ho = (H - 1) // stride + 1
    Wo = (W - 1) // stride + 1
    assert out.shape == (N, Cout, Ho, Wo), out.shape
    ref = reference_forward(x, p, stride, Cin, Cout)
    np.testing.assert_allclose(np.asarray(out), np.asarray(ref), rtol=1e-4, atol=1e-4)


if __name__ == "__main__":
    key = jax.random.PRNGKey(0)
    k1, k2 = jax.random.split(key)
    # downsample branch + stride-2 3x3 path
    run_case(k1, N=2, Cin=8, H=16, W=16, Cout=16, stride=2)
    # identity-skip + stride-1 3x3 path
    run_case(k2, N=2, Cin=16, H=16, W=16, Cout=16, stride=1)
    print("KERNEL_OK")
</pallas_src>

<mosaic_0001>
module attributes {stable_mosaic.version = 11 : i64} {
  func.func @_res_bottleneck_kernel(%arg0: i32, %arg1: memref<8x512xf32, #tpu.memory_space<vmem>>, %arg2: memref<8x8xf32, #tpu.memory_space<vmem>>, %arg3: memref<8x72xf32, #tpu.memory_space<vmem>>, %arg4: memref<16x8xf32, #tpu.memory_space<vmem>>, %arg5: memref<9x1x512xf32, #tpu.memory_space<vmem>>, %arg6: memref<8x2xf32, #tpu.memory_space<vmem>>, %arg7: memref<8x2xf32, #tpu.memory_space<vmem>>, %arg8: memref<16x2xf32, #tpu.memory_space<vmem>>, %arg9: memref<512x128xf32, #tpu.memory_space<vmem>>, %arg10: memref<16x8xf32, #tpu.memory_space<vmem>>, %arg11: memref<16x2xf32, #tpu.memory_space<vmem>>, %arg12: memref<16x128xf32, #tpu.memory_space<vmem>>) attributes {dimension_semantics = [#tpu.dimension_semantics<arbitrary>], iteration_bounds = array<i64: 1>, scalar_prefetch = 0 : i64, scratch_operands = 0 : i64, tpu.core_type = #tpu.core_type<tc>, window_params = [{pipeline_mode = #tpu.pipeline_mode<synchronous>, transform_indices = @transform_0, window_bounds = array<i64: 8, 512>}, {pipeline_mode = #tpu.pipeline_mode<synchronous>, transform_indices = @transform_1, window_bounds = array<i64: 8, 8>}, {pipeline_mode = #tpu.pipeline_mode<synchronous>, transform_indices = @transform_2, window_bounds = array<i64: 8, 72>}, {pipeline_mode = #tpu.pipeline_mode<synchronous>, transform_indices = @transform_3, window_bounds = array<i64: 16, 8>}, {pipeline_mode = #tpu.pipeline_mode<synchronous>, transform_indices = @transform_4, window_bounds = array<i64: 9, 1, 512>}, {pipeline_mode = #tpu.pipeline_mode<synchronous>, transform_indices = @transform_5, window_bounds = array<i64: 8, 2>}, {pipeline_mode = #tpu.pipeline_mode<synchronous>, transform_indices = @transform_6, window_bounds = array<i64: 8, 2>}, {pipeline_mode = #tpu.pipeline_mode<synchronous>, transform_indices = @transform_7, window_bounds = array<i64: 16, 2>}, {pipeline_mode = #tpu.pipeline_mode<synchronous>, transform_indices = @transform_8, window_bounds = array<i64: 512, 128>}, {pipeline_mode = #tpu.pipeline_mode<synchronous>, transform_indices = @transform_9, window_bounds = array<i64: 16, 8>}, {pipeline_mode = #tpu.pipeline_mode<synchronous>, transform_indices = @transform_10, window_bounds = array<i64: 16, 2>}, {pipeline_mode = #tpu.pipeline_mode<synchronous>, transform_indices = @transform_11, window_bounds = array<i64: 16, 128>}]} {
    %c0 = arith.constant 0 : index
    %c0_0 = arith.constant 0 : index
    %0 = vector.load %arg1[%c0, %c0_0] : memref<8x512xf32, #tpu.memory_space<vmem>>, vector<8x512xf32>
    %c0_1 = arith.constant 0 : index
    %c0_2 = arith.constant 0 : index
    %1 = vector.load %arg2[%c0_1, %c0_2] : memref<8x8xf32, #tpu.memory_space<vmem>>, vector<8x8xf32>
    %cst = arith.constant dense<0.000000e+00> : vector<8x512xf32>
    %2 = tpu.matmul %1, %0, %cst {dimension_numbers = #tpu.dot_dimension_numbers<[1], [0], [0], [1], [0, 0, 1, 1], [], []>} : vector<8x8xf32>, vector<8x512xf32>, vector<8x512xf32> -> vector<8x512xf32>
    %c0_3 = arith.constant 0 : index
    %c0_4 = arith.constant 0 : index
    %3 = vector.load %arg6[%c0_3, %c0_4] : memref<8x2xf32, #tpu.memory_space<vmem>>, vector<8x2xf32>
    %cst_5 = arith.constant dense<0.000000e+00> : vector<8xf32>
    %4 = vector.multi_reduction <add>, %2, %cst_5 [1] : vector<8x512xf32> to vector<8xf32>
    %5 = vector.shape_cast %4 : vector<8xf32> to vector<8x1xf32>
    %cst_6 = arith.constant 5.120000e+02 : f32
    %6 = vector.broadcast %cst_6 : f32 to vector<8x1xf32>
    %7 = arith.divf %5, %6 : vector<8x1xf32>
    %8 = vector.broadcast %7 : vector<8x1xf32> to vector<8x512xf32>
    %9 = arith.subf %2, %8 : vector<8x512xf32>
    %10 = vector.broadcast %7 : vector<8x1xf32> to vector<8x512xf32>
    %11 = arith.subf %2, %10 : vector<8x512xf32>
    %12 = arith.mulf %9, %11 : vector<8x512xf32>
    %cst_7 = arith.constant dense<0.000000e+00> : vector<8xf32>
    %13 = vector.multi_reduction <add>, %12, %cst_7 [1] : vector<8x512xf32> to vector<8xf32>
    %14 = vector.shape_cast %13 : vector<8xf32> to vector<8x1xf32>
    %cst_8 = arith.constant 5.120000e+02 : f32
    %15 = vector.broadcast %cst_8 : f32 to vector<8x1xf32>
    %16 = arith.divf %14, %15 : vector<8x1xf32>
    %17 = vector.extract_strided_slice %3 {offsets = [0, 0], sizes = [8, 1], strides = [1, 1]} : vector<8x2xf32> to vector<8x1xf32>
    %cst_9 = arith.constant 9.99999974E-6 : f32
    %18 = vector.broadcast %cst_9 : f32 to vector<8x1xf32>
    %19 = arith.addf %16, %18 : vector<8x1xf32>
    %20 = math.rsqrt %19 : vector<8x1xf32>
    %21 = arith.mulf %17, %20 : vector<8x1xf32>
    %22 = vector.broadcast %21 : vector<8x1xf32> to vector<8x512xf32>
    %23 = arith.mulf %2, %22 : vector<8x512xf32>
    %24 = vector.extract_strided_slice %3 {offsets = [0, 1], sizes = [8, 1], strides = [1, 1]} : vector<8x2xf32> to vector<8x1xf32>
    %25 = arith.mulf %7, %21 : vector<8x1xf32>
    %26 = arith.subf %24, %25 : vector<8x1xf32>
    %27 = vector.broadcast %26 : vector<8x1xf32> to vector<8x512xf32>
    %28 = arith.addf %23, %27 : vector<8x512xf32>
    %cst_10 = arith.constant 0.000000e+00 : f32
    %29 = vector.broadcast %cst_10 : f32 to vector<8x512xf32>
    %30 = arith.maximumf %28, %29 : vector<8x512xf32>
    %c17_i32 = arith.constant 17 : i32
    %31 = tpu.dynamic_rotate %30 by %c17_i32 dim 1 : vector<8x512xf32>, i32 -> vector<8x512xf32>
    %c0_11 = arith.constant 0 : index
    %c0_12 = arith.constant 0 : index
    %c0_13 = arith.constant 0 : index
    %32 = vector.load %arg5[%c0_11, %c0_12, %c0_13] : memref<9x1x512xf32, #tpu.memory_space<vmem>>, vector<1x1x512xf32>
    %33 = vector.shape_cast %32 : vector<1x1x512xf32> to vector<1x512xf32>
    %34 = vector.broadcast %33 : vector<1x512xf32> to vector<8x512xf32>
    %35 = arith.mulf %31, %34 : vector<8x512xf32>
    %c16_i32 = arith.constant 16 : i32
    %36 = tpu.dynamic_rotate %30 by %c16_i32 dim 1 : vector<8x512xf32>, i32 -> vector<8x512xf32>
    %c1 = arith.constant 1 : index
    %c0_14 = arith.constant 0 : index
    %c0_15 = arith.constant 0 : index
    %37 = vector.load %arg5[%c1, %c0_14, %c0_15] : memref<9x1x512xf32, #tpu.memory_space<vmem>>, vector<1x1x512xf32>
    %38 = vector.shape_cast %37 : vector<1x1x512xf32> to vector<1x512xf32>
    %39 = vector.broadcast %38 : vector<1x512xf32> to vector<8x512xf32>
    %40 = arith.mulf %36, %39 : vector<8x512xf32>
    %c15_i32 = arith.constant 15 : i32
    %41 = tpu.dynamic_rotate %30 by %c15_i32 dim 1 : vector<8x512xf32>, i32 -> vector<8x512xf32>
    %c2 = arith.constant 2 : index
    %c0_16 = arith.constant 0 : index
    %c0_17 = arith.constant 0 : index
    %42 = vector.load %arg5[%c2, %c0_16, %c0_17] : memref<9x1x512xf32, #tpu.memory_space<vmem>>, vector<1x1x512xf32>
    %43 = vector.shape_cast %42 : vector<1x1x512xf32> to vector<1x512xf32>
    %44 = vector.broadcast %43 : vector<1x512xf32> to vector<8x512xf32>
    %45 = arith.mulf %41, %44 : vector<8x512xf32>
    %c1_i32 = arith.constant 1 : i32
    %46 = tpu.dynamic_rotate %30 by %c1_i32 dim 1 : vector<8x512xf32>, i32 -> vector<8x512xf32>
    %c3 = arith.constant 3 : index
    %c0_18 = arith.constant 0 : index
    %c0_19 = arith.constant 0 : index
    %47 = vector.load %arg5[%c3, %c0_18, %c0_19] : memref<9x1x512xf32, #tpu.memory_space<vmem>>, vector<1x1x512xf32>
    %48 = vector.shape_cast %47 : vector<1x1x512xf32> to vector<1x512xf32>
    %49 = vector.broadcast %48 : vector<1x512xf32> to vector<8x512xf32>
    %50 = arith.mulf %46, %49 : vector<8x512xf32>
    %c4 = arith.constant 4 : index
    %c0_20 = arith.constant 0 : index
    %c0_21 = arith.constant 0 : index
    %51 = vector.load %arg5[%c4, %c0_20, %c0_21] : memref<9x1x512xf32, #tpu.memory_space<vmem>>, vector<1x1x512xf32>
    %52 = vector.shape_cast %51 : vector<1x1x512xf32> to vector<1x512xf32>
    %53 = vector.broadcast %52 : vector<1x512xf32> to vector<8x512xf32>
    %54 = arith.mulf %30, %53 : vector<8x512xf32>
    %c511_i32 = arith.constant 511 : i32
    %55 = tpu.dynamic_rotate %30 by %c511_i32 dim 1 : vector<8x512xf32>, i32 -> vector<8x512xf32>
    %c5 = arith.constant 5 : index
    %c0_22 = arith.constant 0 : index
    %c0_23 = arith.constant 0 : index
    %56 = vector.load %arg5[%c5, %c0_22, %c0_23] : memref<9x1x512xf32, #tpu.memory_space<vmem>>, vector<1x1x512xf32>
    %57 = vector.shape_cast %56 : vector<1x1x512xf32> to vector<1x512xf32>
    %58 = vector.broadcast %57 : vector<1x512xf32> to vector<8x512xf32>
    %59 = arith.mulf %55, %58 : vector<8x512xf32>
    %c497_i32 = arith.constant 497 : i32
    %60 = tpu.dynamic_rotate %30 by %c497_i32 dim 1 : vector<8x512xf32>, i32 -> vector<8x512xf32>
    %c6 = arith.constant 6 : index
    %c0_24 = arith.constant 0 : index
    %c0_25 = arith.constant 0 : index
    %61 = vector.load %arg5[%c6, %c0_24, %c0_25] : memref<9x1x512xf32, #tpu.memory_space<vmem>>, vector<1x1x512xf32>
    %62 = vector.shape_cast %61 : vector<1x1x512xf32> to vector<1x512xf32>
    %63 = vector.broadcast %62 : vector<1x512xf32> to vector<8x512xf32>
    %64 = arith.mulf %60, %63 : vector<8x512xf32>
    %c496_i32 = arith.constant 496 : i32
    %65 = tpu.dynamic_rotate %30 by %c496_i32 dim 1 : vector<8x512xf32>, i32 -> vector<8x512xf32>
    %c7 = arith.constant 7 : index
    %c0_26 = arith.constant 0 : index
    %c0_27 = arith.constant 0 : index
    %66 = vector.load %arg5[%c7, %c0_26, %c0_27] : memref<9x1x512xf32, #tpu.memory_space<vmem>>, vector<1x1x512xf32>
    %67 = vector.shape_cast %66 : vector<1x1x512xf32> to vector<1x512xf32>
    %68 = vector.broadcast %67 : vector<1x512xf32> to vector<8x512xf32>
    %69 = arith.mulf %65, %68 : vector<8x512xf32>
    %c495_i32 = arith.constant 495 : i32
    %70 = tpu.dynamic_rotate %30 by %c495_i32 dim 1 : vector<8x512xf32>, i32 -> vector<8x512xf32>
    %c8 = arith.constant 8 : index
    %c0_28 = arith.constant 0 : index
    %c0_29 = arith.constant 0 : index
    %71 = vector.load %arg5[%c8, %c0_28, %c0_29] : memref<9x1x512xf32, #tpu.memory_space<vmem>>, vector<1x1x512xf32>
    %72 = vector.shape_cast %71 : vector<1x1x512xf32> to vector<1x512xf32>
    %73 = vector.broadcast %72 : vector<1x512xf32> to vector<8x512xf32>
    %74 = arith.mulf %70, %73 : vector<8x512xf32>
    %75 = tpu.concatenate %35, %40, %45, %50, %54, %59, %64, %69, %74 in 0 : vector<8x512xf32>, vector<8x512xf32>, vector<8x512xf32>, vector<8x512xf32>, vector<8x512xf32>, vector<8x512xf32>, vector<8x512xf32>, vector<8x512xf32>, vector<8x512xf32> -> vector<72x512xf32>
    %c0_30 = arith.constant 0 : index
    %c0_31 = arith.constant 0 : index
    %76 = vector.load %arg3[%c0_30, %c0_31] : memref<8x72xf32, #tpu.memory_space<vmem>>, vector<8x72xf32>
    %cst_32 = arith.constant dense<0.000000e+00> : vector<8x512xf32>
    %77 = tpu.matmul %76, %75, %cst_32 {dimension_numbers = #tpu.dot_dimension_numbers<[1], [0], [0], [1], [0, 0, 1, 1], [], []>} : vector<8x72xf32>, vector<72x512xf32>, vector<8x512xf32> -> vector<8x512xf32>
    %c0_33 = arith.constant 0 : index
    %c0_34 = arith.constant 0 : index
    %78 = vector.load %arg9[%c0_33, %c0_34] : memref<512x128xf32, #tpu.memory_space<vmem>>, vector<512x128xf32>
    %cst_35 = arith.constant dense<0.000000e+00> : vector<8x128xf32>
    %79 = tpu.matmul %77, %78, %cst_35 {dimension_numbers = #tpu.dot_dimension_numbers<[1], [0], [0], [1], [0, 0, 1, 1], [], []>} : vector<8x512xf32>, vector<512x128xf32>, vector<8x128xf32> -> vector<8x128xf32>
    %c0_36 = arith.constant 0 : index
    %c0_37 = arith.constant 0 : index
    %80 = vector.load %arg7[%c0_36, %c0_37] : memref<8x2xf32, #tpu.memory_space<vmem>>, vector<8x2xf32>
    %cst_38 = arith.constant dense<0.000000e+00> : vector<8xf32>
    %81 = vector.multi_reduction <add>, %79, %cst_38 [1] : vector<8x128xf32> to vector<8xf32>
    %82 = vector.shape_cast %81 : vector<8xf32> to vector<8x1xf32>
    %cst_39 = arith.constant 1.280000e+02 : f32
    %83 = vector.broadcast %cst_39 : f32 to vector<8x1xf32>
    %84 = arith.divf %82, %83 : vector<8x1xf32>
    %85 = vector.broadcast %84 : vector<8x1xf32> to vector<8x128xf32>
    %86 = arith.subf %79, %85 : vector<8x128xf32>
    %87 = vector.broadcast %84 : vector<8x1xf32> to vector<8x128xf32>
    %88 = arith.subf %79, %87 : vector<8x128xf32>
    %89 = arith.mulf %86, %88 : vector<8x128xf32>
    %cst_40 = arith.constant dense<0.000000e+00> : vector<8xf32>
    %90 = vector.multi_reduction <add>, %89, %cst_40 [1] : vector<8x128xf32> to vector<8xf32>
    %91 = vector.shape_cast %90 : vector<8xf32> to vector<8x1xf32>
    %cst_41 = arith.constant 1.280000e+02 : f32
    %92 = vector.broadcast %cst_41 : f32 to vector<8x1xf32>
    %93 = arith.divf %91, %92 : vector<8x1xf32>
    %94 = vector.extract_strided_slice %80 {offsets = [0, 0], sizes = [8, 1], strides = [1, 1]} : vector<8x2xf32> to vector<8x1xf32>
    %cst_42 = arith.constant 9.99999974E-6 : f32
    %95 = vector.broadcast %cst_42 : f32 to vector<8x1xf32>
    %96 = arith.addf %93, %95 : vector<8x1xf32>
    %97 = math.rsqrt %96 : vector<8x1xf32>
    %98 = arith.mulf %94, %97 : vector<8x1xf32>
    %99 = vector.broadcast %98 : vector<8x1xf32> to vector<8x128xf32>
    %100 = arith.mulf %79, %99 : vector<8x128xf32>
    %101 = vector.extract_strided_slice %80 {offsets = [0, 1], sizes = [8, 1], strides = [1, 1]} : vector<8x2xf32> to vector<8x1xf32>
    %102 = arith.mulf %84, %98 : vector<8x1xf32>
    %103 = arith.subf %101, %102 : vector<8x1xf32>
    %104 = vector.broadcast %103 : vector<8x1xf32> to vector<8x128xf32>
    %105 = arith.addf %100, %104 : vector<8x128xf32>
    %cst_43 = arith.constant 0.000000e+00 : f32
    %106 = vector.broadcast %cst_43 : f32 to vector<8x128xf32>
    %107 = arith.maximumf %105, %106 : vector<8x128xf32>
    %c0_44 = arith.constant 0 : index
    %c0_45 = arith.constant 0 : index
    %108 = vector.load %arg4[%c0_44, %c0_45] : memref<16x8xf32, #tpu.memory_space<vmem>>, vector<16x8xf32>
    %cst_46 = arith.constant dense<0.000000e+00> : vector<16x128xf32>
    %109 = tpu.matmul %108, %107, %cst_46 {dimension_numbers = #tpu.dot_dimension_numbers<[1], [0], [0], [1], [0, 0, 1, 1], [], []>} : vector<16x8xf32>, vector<8x128xf32>, vector<16x128xf32> -> vector<16x128xf32>
    %c0_47 = arith.constant 0 : index
    %c0_48 = arith.constant 0 : index
    %110 = vector.load %arg8[%c0_47, %c0_48] : memref<16x2xf32, #tpu.memory_space<vmem>>, vector<16x2xf32>
    %cst_49 = arith.constant dense<0.000000e+00> : vector<16xf32>
    %111 = vector.multi_reduction <add>, %109, %cst_49 [1] : vector<16x128xf32> to vector<16xf32>
    %112 = vector.shape_cast %111 : vector<16xf32> to vector<16x1xf32>
    %cst_50 = arith.constant 1.280000e+02 : f32
    %113 = vector.broadcast %cst_50 : f32 to vector<16x1xf32>
    %114 = arith.divf %112, %113 : vector<16x1xf32>
    %115 = vector.broadcast %114 : vector<16x1xf32> to vector<16x128xf32>
    %116 = arith.subf %109, %115 : vector<16x128xf32>
    %117 = vector.broadcast %114 : vector<16x1xf32> to vector<16x128xf32>
    %118 = arith.subf %109, %117 : vector<16x128xf32>
    %119 = arith.mulf %116, %118 : vector<16x128xf32>
    %cst_51 = arith.constant dense<0.000000e+00> : vector<16xf32>
    %120 = vector.multi_reduction <add>, %119, %cst_51 [1] : vector<16x128xf32> to vector<16xf32>
    %121 = vector.shape_cast %120 : vector<16xf32> to vector<16x1xf32>
    %cst_52 = arith.constant 1.280000e+02 : f32
    %122 = vector.broadcast %cst_52 : f32 to vector<16x1xf32>
    %123 = arith.divf %121, %122 : vector<16x1xf32>
    %124 = vector.extract_strided_slice %110 {offsets = [0, 0], sizes = [16, 1], strides = [1, 1]} : vector<16x2xf32> to vector<16x1xf32>
    %cst_53 = arith.constant 9.99999974E-6 : f32
    %125 = vector.broadcast %cst_53 : f32 to vector<16x1xf32>
    %126 = arith.addf %123, %125 : vector<16x1xf32>
    %127 = math.rsqrt %126 : vector<16x1xf32>
    %128 = arith.mulf %124, %127 : vector<16x1xf32>
    %129 = vector.broadcast %128 : vector<16x1xf32> to vector<16x128xf32>
    %130 = arith.mulf %109, %129 : vector<16x128xf32>
    %131 = vector.extract_strided_slice %110 {offsets = [0, 1], sizes = [16, 1], strides = [1, 1]} : vector<16x2xf32> to vector<16x1xf32>
    %132 = arith.mulf %114, %128 : vector<16x1xf32>
    %133 = arith.subf %131, %132 : vector<16x1xf32>
    %134 = vector.broadcast %133 : vector<16x1xf32> to vector<16x128xf32>
    %135 = arith.addf %130, %134 : vector<16x128xf32>
    %c0_54 = arith.constant 0 : index
    %c0_55 = arith.constant 0 : index
    %136 = vector.load %arg9[%c0_54, %c0_55] : memref<512x128xf32, #tpu.memory_space<vmem>>, vector<512x128xf32>
    %cst_56 = arith.constant dense<0.000000e+00> : vector<8x128xf32>
    %137 = tpu.matmul %0, %136, %cst_56 {dimension_numbers = #tpu.dot_dimension_numbers<[1], [0], [0], [1], [0, 0, 1, 1], [], []>} : vector<8x512xf32>, vector<512x128xf32>, vector<8x128xf32> -> vector<8x128xf32>
    %c0_57 = arith.constant 0 : index
    %c0_58 = arith.constant 0 : index
    %138 = vector.load %arg10[%c0_57, %c0_58] : memref<16x8xf32, #tpu.memory_space<vmem>>, vector<16x8xf32>
    %cst_59 = arith.constant dense<0.000000e+00> : vector<16x128xf32>
    %139 = tpu.matmul %138, %137, %cst_59 {dimension_numbers = #tpu.dot_dimension_numbers<[1], [0], [0], [1], [0, 0, 1, 1], [], []>} : vector<16x8xf32>, vector<8x128xf32>, vector<16x128xf32> -> vector<16x128xf32>
    %c0_60 = arith.constant 0 : index
    %c0_61 = arith.constant 0 : index
    %140 = vector.load %arg11[%c0_60, %c0_61] : memref<16x2xf32, #tpu.memory_space<vmem>>, vector<16x2xf32>
    %cst_62 = arith.constant dense<0.000000e+00> : vector<16xf32>
    %141 = vector.multi_reduction <add>, %139, %cst_62 [1] : vector<16x128xf32> to vector<16xf32>
    %142 = vector.shape_cast %141 : vector<16xf32> to vector<16x1xf32>
    %cst_63 = arith.constant 1.280000e+02 : f32
    %143 = vector.broadcast %cst_63 : f32 to vector<16x1xf32>
    %144 = arith.divf %142, %143 : vector<16x1xf32>
    %145 = vector.broadcast %144 : vector<16x1xf32> to vector<16x128xf32>
    %146 = arith.subf %139, %145 : vector<16x128xf32>
    %147 = vector.broadcast %144 : vector<16x1xf32> to vector<16x128xf32>
    %148 = arith.subf %139, %147 : vector<16x128xf32>
    %149 = arith.mulf %146, %148 : vector<16x128xf32>
    %cst_64 = arith.constant dense<0.000000e+00> : vector<16xf32>
    %150 = vector.multi_reduction <add>, %149, %cst_64 [1] : vector<16x128xf32> to vector<16xf32>
    %151 = vector.shape_cast %150 : vector<16xf32> to vector<16x1xf32>
    %cst_65 = arith.constant 1.280000e+02 : f32
    %152 = vector.broadcast %cst_65 : f32 to vector<16x1xf32>
    %153 = arith.divf %151, %152 : vector<16x1xf32>
    %154 = vector.extract_strided_slice %140 {offsets = [0, 0], sizes = [16, 1], strides = [1, 1]} : vector<16x2xf32> to vector<16x1xf32>
    %cst_66 = arith.constant 9.99999974E-6 : f32
    %155 = vector.broadcast %cst_66 : f32 to vector<16x1xf32>
    %156 = arith.addf %153, %155 : vector<16x1xf32>
    %157 = math.rsqrt %156 : vector<16x1xf32>
    %158 = arith.mulf %154, %157 : vector<16x1xf32>
    %159 = vector.broadcast %158 : vector<16x1xf32> to vector<16x128xf32>
    %160 = arith.mulf %139, %159 : vector<16x128xf32>
    %161 = vector.extract_strided_slice %140 {offsets = [0, 1], sizes = [16, 1], strides = [1, 1]} : vector<16x2xf32> to vector<16x1xf32>
    %162 = arith.mulf %144, %158 : vector<16x1xf32>
    %163 = arith.subf %161, %162 : vector<16x1xf32>
    %164 = vector.broadcast %163 : vector<16x1xf32> to vector<16x128xf32>
    %165 = arith.addf %160, %164 : vector<16x128xf32>
    %166 = arith.addf %135, %165 : vector<16x128xf32>
    %cst_67 = arith.constant 0.000000e+00 : f32
    %167 = vector.broadcast %cst_67 : f32 to vector<16x128xf32>
    %168 = arith.maximumf %166, %167 : vector<16x128xf32>
    %c0_68 = arith.constant 0 : index
    %c0_69 = arith.constant 0 : index
    %169 = vector.load %arg12[%c0_68, %c0_69] : memref<16x128xf32, #tpu.memory_space<vmem>>, vector<16x128xf32>
    tpu.vector_store %arg12[%c0_68, %c0_69], %168 {strides = array<i32>} : memref<16x128xf32, #tpu.memory_space<vmem>>, vector<16x128xf32>,
    return
  }
  func.func @transform_0(%arg0: i32) -> (i32, i32) {
    %c0_i32 = arith.constant 0 : i32
    %c0_i32_0 = arith.constant 0 : i32
    %c0_i32_1 = arith.constant 0 : i32
    return %c0_i32, %c0_i32_0 : i32, i32
  }
  func.func @transform_1(%arg0: i32) -> (i32, i32) {
    %c0_i32 = arith.constant 0 : i32
    %c0_i32_0 = arith.constant 0 : i32
    %c0_i32_1 = arith.constant 0 : i32
    return %c0_i32, %c0_i32_0 : i32, i32
  }
  func.func @transform_2(%arg0: i32) -> (i32, i32) {
    %c0_i32 = arith.constant 0 : i32
    %c0_i32_0 = arith.constant 0 : i32
    %c0_i32_1 = arith.constant 0 : i32
    return %c0_i32, %c0_i32_0 : i32, i32
  }
  func.func @transform_3(%arg0: i32) -> (i32, i32) {
    %c0_i32 = arith.constant 0 : i32
    %c0_i32_0 = arith.constant 0 : i32
    %c0_i32_1 = arith.constant 0 : i32
    return %c0_i32, %c0_i32_0 : i32, i32
  }
  func.func @transform_4(%arg0: i32) -> (i32, i32, i32) {
    %c0_i32 = arith.constant 0 : i32
    %c0_i32_0 = arith.constant 0 : i32
    %c0_i32_1 = arith.constant 0 : i32
    %c0_i32_2 = arith.constant 0 : i32
    return %c0_i32, %c0_i32_0, %c0_i32_1 : i32, i32, i32
  }
  func.func @transform_5(%arg0: i32) -> (i32, i32) {
    %c0_i32 = arith.constant 0 : i32
    %c0_i32_0 = arith.constant 0 : i32
    %c0_i32_1 = arith.constant 0 : i32
    return %c0_i32, %c0_i32_0 : i32, i32
  }
  func.func @transform_6(%arg0: i32) -> (i32, i32) {
    %c0_i32 = arith.constant 0 : i32
    %c0_i32_0 = arith.constant 0 : i32
    %c0_i32_1 = arith.constant 0 : i32
    return %c0_i32, %c0_i32_0 : i32, i32
  }
  func.func @transform_7(%arg0: i32) -> (i32, i32) {
    %c0_i32 = arith.constant 0 : i32
    %c0_i32_0 = arith.constant 0 : i32
    %c0_i32_1 = arith.constant 0 : i32
    return %c0_i32, %c0_i32_0 : i32, i32
  }
  func.func @transform_8(%arg0: i32) -> (i32, i32) {
    %c0_i32 = arith.constant 0 : i32
    %c0_i32_0 = arith.constant 0 : i32
    %c0_i32_1 = arith.constant 0 : i32
    return %c0_i32, %c0_i32_0 : i32, i32
  }
  func.func @transform_9(%arg0: i32) -> (i32, i32) {
    %c0_i32 = arith.constant 0 : i32
    %c0_i32_0 = arith.constant 0 : i32
    %c0_i32_1 = arith.constant 0 : i32
    return %c0_i32, %c0_i32_0 : i32, i32
  }
  func.func @transform_10(%arg0: i32) -> (i32, i32) {
    %c0_i32 = arith.constant 0 : i32
    %c0_i32_0 = arith.constant 0 : i32
    %c0_i32_1 = arith.constant 0 : i32
    return %c0_i32, %c0_i32_0 : i32, i32
  }
  func.func @transform_11(%arg0: i32) -> (i32, i32) {
    %c0_i32 = arith.constant 0 : i32
    %c0_i32_0 = arith.constant 0 : i32
    %c0_i32_1 = arith.constant 0 : i32
    return %c0_i32, %c0_i32_0 : i32, i32
  }
}

</mosaic_0001>

<llo_original>
// kernel: res_bottleneck_forward.1
$region0: #{res_bottleneck_forward.1}
  #allocation0 [shape = 'u32[]', space=smem, size = 0x4, offset = 0x4, fixed_abs, tag = 'smem constant byte address 0x4 - core index']
  #allocation1 [shape = 'u32[72,128]{1,0:T(1,128)}', space=vmem, size = 0x9000, scoped, tag = 'internal scratch']
  %s0 = inlined_call_operand.vmem [shape: f32[8,512], index: 0, kind: input, shape index: {}]
  %s1 = inlined_call_operand.vmem [shape: f32[8,8], index: 1, kind: input, shape index: {}]
  %s2 = inlined_call_operand.vmem [shape: f32[8,72], index: 2, kind: input, shape index: {}]
  %s3 = inlined_call_operand.vmem [shape: f32[16,8], index: 3, kind: input, shape index: {}]
  %s4 = inlined_call_operand.vmem [shape: f32[9,1,512], index: 4, kind: input, shape index: {}]
  %s5 = inlined_call_operand.vmem [shape: f32[8,2], index: 5, kind: input, shape index: {}]
  %s6 = inlined_call_operand.vmem [shape: f32[8,2], index: 6, kind: input, shape index: {}]
  %s7 = inlined_call_operand.vmem [shape: f32[16,2], index: 7, kind: input, shape index: {}]
  %s8 = inlined_call_operand.hbm [shape: f32[512,128], index: 8, kind: input, shape index: {}]
  %s9 = inlined_call_operand.vmem [shape: f32[16,8], index: 9, kind: input, shape index: {}]
  %s10 = inlined_call_operand.vmem [shape: f32[16,2], index: 10, kind: input, shape index: {}]
  %s11 = inlined_call_operand.vmem [shape: f32[16,128], index: 11, kind: output, shape index: {}]
  %s12 = sld [smem:[#allocation0]]
  $region58: #{res_bottleneck_forward.1} parent=0
    _
  %s14 = ssub.s32 1, %s12
  %s15 = scalar_select 0, %s14, %s12
  $region1: #{res_bottleneck_forward.1} parent=0
    #allocation2 [shape = 'u8[262144]{0}', space=vmem, size = 0x40000, scoped, tag = 'input window, operand 8, single buffered']
    #allocation3 [shape = 's32[1]{0}', space=sflag, size = 0x4, scoped, tag = 'scoped memory for res_bottleneck_forward.1']
    %16 = vsyncpa [#allocation3], 0
    // Predicated region
    $region2: #{res_bottleneck_forward.1} parent=1 // pred_check
      _
    $region3: #{res_bottleneck_forward.1} parent=1 // pred_check_branch
      %18 = sbr.rel (0) target = $region5
    $region4: #{res_bottleneck_forward.1} parent=1 // pred_region
      _
    $region5: #{res_bottleneck_forward.1} parent=1 // pred_fallthru
      _
    // Predicated region
    $region6: #{res_bottleneck_forward.1} parent=1 // pred_check
      _
    $region7: #{res_bottleneck_forward.1} parent=1 // pred_check_branch
      %20 = sbr.rel (0) target = $region9
    $region8: #{res_bottleneck_forward.1} parent=1 // pred_region
      _
    $region9: #{res_bottleneck_forward.1} parent=1 // pred_fallthru
      _
    // Predicated region
    $region10: #{res_bottleneck_forward.1} parent=1 // pred_check
      _
    $region11: #{res_bottleneck_forward.1} parent=1 // pred_check_branch
      %22 = sbr.rel (0) target = $region13
    $region12: #{res_bottleneck_forward.1} parent=1 // pred_region
      _
    $region13: #{res_bottleneck_forward.1} parent=1 // pred_fallthru
      _
    // Predicated region
    $region14: #{res_bottleneck_forward.1} parent=1 // pred_check
      _
    $region15: #{res_bottleneck_forward.1} parent=1 // pred_check_branch
      %24 = sbr.rel (0) target = $region17
    $region16: #{res_bottleneck_forward.1} parent=1 // pred_region
      _
    $region17: #{res_bottleneck_forward.1} parent=1 // pred_fallthru
      _
    // Predicated region
    $region18: #{res_bottleneck_forward.1} parent=1 // pred_check
      _
    $region19: #{res_bottleneck_forward.1} parent=1 // pred_check_branch
      %26 = sbr.rel (0) target = $region21
    $region20: #{res_bottleneck_forward.1} parent=1 // pred_region
      _
    $region21: #{res_bottleneck_forward.1} parent=1 // pred_fallthru
      _
    // Predicated region
    $region22: #{res_bottleneck_forward.1} parent=1 // pred_check
      _
    $region23: #{res_bottleneck_forward.1} parent=1 // pred_check_branch
      %28 = sbr.rel (0) target = $region25
    $region24: #{res_bottleneck_forward.1} parent=1 // pred_region
      _
    $region25: #{res_bottleneck_forward.1} parent=1 // pred_fallthru
      _
    // Predicated region
    $region26: #{res_bottleneck_forward.1} parent=1 // pred_check
      _
    $region27: #{res_bottleneck_forward.1} parent=1 // pred_check_branch
      %30 = sbr.rel (0) target = $region29
    $region28: #{res_bottleneck_forward.1} parent=1 // pred_region
      _
    $region29: #{res_bottleneck_forward.1} parent=1 // pred_fallthru
      _
    // Predicated region
    $region30: #{res_bottleneck_forward.1} parent=1 // pred_check
      _
    $region31: #{res_bottleneck_forward.1} parent=1 // pred_check_branch
      %32 = sbr.rel (0) target = $region33
    $region32: #{res_bottleneck_forward.1} parent=1 // pred_region
      _
    $region33: #{res_bottleneck_forward.1} parent=1 // pred_fallthru
      _
    // Predicated region
    $region34: #{res_bottleneck_forward.1} parent=1 // pred_check
      _
    $region35: #{res_bottleneck_forward.1} parent=1 // pred_check_branch
      %34 = sbr.rel (0) target = $region37
    $region36: #{res_bottleneck_forward.1} parent=1 // pred_region
      %36 = vsyncadd [#allocation3], 0
      %s37 = sshll.u32 %s8, 4
      %s38 = int_to_ptr.hbm [resolvable:$true] %s37
      %s39 = sshll.u32 [#allocation2], 4
      %s40 = int_to_ptr.vmem [resolvable:$true] %s39
      %45 = dma.hbm_to_vmem [thread:$0]  %s38, 8192, %s40, [#allocation3], 128, 128, 8
    $region37: #{res_bottleneck_forward.1} parent=1 // pred_fallthru
      _
    // Predicated region
    $region38: #{res_bottleneck_forward.1} parent=1 // pred_check
      _
    $region39: #{res_bottleneck_forward.1} parent=1 // pred_check_branch
      %47 = sbr.rel (0) target = $region41
    $region40: #{res_bottleneck_forward.1} parent=1 // pred_region
      _
    $region41: #{res_bottleneck_forward.1} parent=1 // pred_fallthru
      _
    // Predicated region
    $region42: #{res_bottleneck_forward.1} parent=1 // pred_check
      _
    $region43: #{res_bottleneck_forward.1} parent=1 // pred_check_branch
      %49 = sbr.rel (0) target = $region45
    $region44: #{res_bottleneck_forward.1} parent=1 // pred_region
      _
    $region45: #{res_bottleneck_forward.1} parent=1 // pred_fallthru
      _
    // Predicated region
    $region46: #{res_bottleneck_forward.1} parent=1 // pred_check
      _
    $region47: #{res_bottleneck_forward.1} parent=1 // pred_check_branch
      %51 = sbr.rel (0) target = $region49
    $region48: #{res_bottleneck_forward.1} parent=1 // pred_region
      %53 = dma.done [#allocation3], 8192
    $region49: #{res_bottleneck_forward.1} parent=1 // pred_fallthru
      _
    %v54 = vld [vmem:[%s0] sm:$0xff]
    %v55 = vld [vmem:[%s0 + $0x8] sm:$0xff]
    %v56 = vld [vmem:[%s0 + $0x10] sm:$0xff]
    %v57 = vld [vmem:[%s0 + $0x18] sm:$0xff]
    %v58 = vld [vmem:[%s1] sm:$0xff]
    %vm59 = vcmask 64512
    %v61 = vsel %vm59, %v58, 0
    %63 = vmatpush.msra.mxu0 0.0
    %64 = vmatpush.msra.mxu0 0.0
    %65 = vmatpush.msra.mxu0 0.0
    %66 = vmatpush.msra.mxu0 0.0
    %67 = vmatpush.msra.mxu0 0.0
    %68 = vmatpush.msra.mxu0 0.0
    %69 = vmatpush.msra.mxu0 0.0
    %70 = vmatpush.msra.mxu0 0.0
    %71 = vmatpush.msra.mxu0 0.0
    %72 = vmatpush.msra.mxu0 0.0
    %73 = vmatpush.msra.mxu0 0.0
    %74 = vmatpush.msra.mxu0 0.0
    %75 = vmatpush.msra.mxu0 0.0
    %76 = vmatpush.msra.mxu0 0.0
    %77 = vmatpush.msra.mxu0 0.0
    %78 = vmatpush.msra.mxu0 %v54
    %79 = vmatmul.f32.gmra.mxu0 %v61
    %v80 = vpop.f32.mrf.mxu0
    %v81 = vadd.f32 0.0, %v80
    %82 = vdwg.mxu0
    %83 = vmatpush.msra.mxu0 0.0
    %84 = vmatpush.msra.mxu0 0.0
    %85 = vmatpush.msra.mxu0 0.0
    %86 = vmatpush.msra.mxu0 0.0
    %87 = vmatpush.msra.mxu0 0.0
    %88 = vmatpush.msra.mxu0 0.0
    %89 = vmatpush.msra.mxu0 0.0
    %90 = vmatpush.msra.mxu0 0.0
    %91 = vmatpush.msra.mxu0 0.0
    %92 = vmatpush.msra.mxu0 0.0
    %93 = vmatpush.msra.mxu0 0.0
    %94 = vmatpush.msra.mxu0 0.0
    %95 = vmatpush.msra.mxu0 0.0
    %96 = vmatpush.msra.mxu0 0.0
    %97 = vmatpush.msra.mxu0 0.0
    %98 = vmatpush.msra.mxu0 %v55
    %99 = vmatmul.f32.gmra.mxu0 %v61
    %v100 = vpop.f32.mrf.mxu0
    %v101 = vadd.f32 0.0, %v100
    %102 = vdwg.mxu0
    %103 = vmatpush.msra.mxu0 0.0
    %104 = vmatpush.msra.mxu0 0.0
    %105 = vmatpush.msra.mxu0 0.0
    %106 = vmatpush.msra.mxu0 0.0
    %107 = vmatpush.msra.mxu0 0.0
    %108 = vmatpush.msra.mxu0 0.0
    %109 = vmatpush.msra.mxu0 0.0
    %110 = vmatpush.msra.mxu0 0.0
    %111 = vmatpush.msra.mxu0 0.0
    %112 = vmatpush.msra.mxu0 0.0
    %113 = vmatpush.msra.mxu0 0.0
    %114 = vmatpush.msra.mxu0 0.0
    %115 = vmatpush.msra.mxu0 0.0
    %116 = vmatpush.msra.mxu0 0.0
    %117 = vmatpush.msra.mxu0 0.0
    %118 = vmatpush.msra.mxu0 %v56
    %119 = vmatmul.f32.gmra.mxu0 %v61
    %v120 = vpop.f32.mrf.mxu0
    %v121 = vadd.f32 0.0, %v120
    %122 = vdwg.mxu0
    %123 = vmatpush.msra.mxu0 0.0
    %124 = vmatpush.msra.mxu0 0.0
    %125 = vmatpush.msra.mxu0 0.0
    %126 = vmatpush.msra.mxu0 0.0
    %127 = vmatpush.msra.mxu0 0.0
    %128 = vmatpush.msra.mxu0 0.0
    %129 = vmatpush.msra.mxu0 0.0
    %130 = vmatpush.msra.mxu0 0.0
    %131 = vmatpush.msra.mxu0 0.0
    %132 = vmatpush.msra.mxu0 0.0
    %133 = vmatpush.msra.mxu0 0.0
    %134 = vmatpush.msra.mxu0 0.0
    %135 = vmatpush.msra.mxu0 0.0
    %136 = vmatpush.msra.mxu0 0.0
    %137 = vmatpush.msra.mxu0 0.0
    %138 = vmatpush.msra.mxu0 %v57
    %139 = vmatmul.f32.gmra.mxu0 %v61
    %v140 = vpop.f32.mrf.mxu0
    %v141 = vadd.f32 0.0, %v140
    %142 = vdwg.mxu0
    %v143 = vld [vmem:[%s5] sm:$0xff]
    %v144 = vadd.f32 %v81, %v101
    %v145 = vadd.f32 %v144, %v121
    %v146 = vadd.f32 %v145, %v141
    %147 = vadd.xlane.f32.xlu0 %v146
    %v148 = vpop.xlane.xlu0 %147
    %v149 = vrcp.pop 512.0
    %v150 = vmul.f32 512.0, %v149
    %v151 = vsub.f32 1.0, %v150
    %v152 = vmul.f32 %v149, %v151
    %v153 = vadd.f32 %v149, %v152
    %vm154 = vweird.f32 %v149
    %v155 = vsel %vm154, %v149, %v153
    %v156 = vmul.f32 %v148, %v155
    %v157 = vsub.f32 %v81, %v156
    %v158 = vsub.f32 %v101, %v156
    %v159 = vsub.f32 %v121, %v156
    %v160 = vsub.f32 %v141, %v156
    %v161 = vmul.f32 %v157, %v157
    %v162 = vmul.f32 %v158, %v158
    %v163 = vmul.f32 %v159, %v159
    %v164 = vmul.f32 %v160, %v160
    %v165 = vadd.f32 %v161, %v162
    %v166 = vadd.f32 %v165, %v163
    %v167 = vadd.f32 %v166, %v164
    %168 = vadd.xlane.f32.xlu0 %v167
    %v169 = vpop.xlane.xlu0 %168
    %v170 = vmul.f32 %v169, %v155
    %v171 = vadd.f32 %v170, 1e-05
    %v172 = vrsqrt.pop %v171
    %v173 = vmul.f32 %v172, %v171
    %v174 = vmul.f32 %v173, %v172
    %v175 = vmul.f32 0.5, %v174
    %v176 = vsub.f32 1.5, %v175
    %v177 = vmul.f32 %v172, %v176
    %vm178 = vweird.f32 %v171
    %vm179 = vweird.f32 %v172
    %vm180 = vmor %vm178, %vm179
    %v181 = vsel %vm180, %v172, %v177
    %v182 = vmul.f32 %v143, %v181
    %184 = vset.pattern.permute.xlu0 0
    %185 = vperm.xlu0 %184, %v182
    %v186 = vpop.permute.xlu0 %185
    %v188 = vmul.f32 %v81, %v186
    %v189 = vmul.f32 %v101, %v186
    %v190 = vmul.f32 %v121, %v186
    %v191 = vmul.f32 %v141, %v186
    %v192 = vmul.f32 %v156, %v182
    %194 = vrot.lane.b32.xlu0 %v192, 1
    %v195 = vpop.permute.xlu0 %194
    %v197 = vsub.f32 %v143, %v195
    %199 = vset.pattern.permute.xlu0 1
    %200 = vperm.xlu0 %199, %v197
    %v201 = vpop.permute.xlu0 %200
    %v203 = vadd.f32 %v188, %v201
    %v204 = vadd.f32 %v189, %v201
    %v205 = vadd.f32 %v190, %v201
    %v206 = vadd.f32 %v191, %v201
    %v207 = vmax.f32 %v203, 0.0
    %v208 = vmax.f32 %v204, 0.0
    %v209 = vmax.f32 %v205, 0.0
    %v210 = vmax.f32 %v206, 0.0
    %211 = vrot.lane.b32.xlu0 %v207, 17
    %v212 = vpop.permute.xlu0 %211
    %213 = vrot.lane.b32.xlu0 %v208, 17
    %v214 = vpop.permute.xlu0 %213
    %215 = vrot.lane.b32.xlu0 %v209, 17
    %v216 = vpop.permute.xlu0 %215
    %217 = vrot.lane.b32.xlu0 %v210, 17
    %v218 = vpop.permute.xlu0 %217
    %v219 = vlaneseq
    %v220 = vand.u32 %v219, 127
    %vm221 = vcmp.lt.s32.totalorder %v220, 17
    %v222 = vsel %vm221, %v216, %v218
    %v223 = vsel %vm221, %v214, %v216
    %v224 = vsel %vm221, %v212, %v214
    %v225 = vsel %vm221, %v218, %v212
    %v226 = vld [vmem:[%s4] sm:$0xf]
    %v228 = vperm.slane %v226, 0
    %v229 = vperm.slane %v226, 1
    %v230 = vperm.slane %v226, 2
    %v231 = vperm.slane %v226, 3
    %v236 = vmul.f32 %v225, %v228
    %v237 = vmul.f32 %v224, %v229
    %v238 = vmul.f32 %v223, %v230
    %v239 = vmul.f32 %v222, %v231
    %240 = vrot.lane.b32.xlu0 %v207, 16
    %v241 = vpop.permute.xlu0 %240
    %242 = vrot.lane.b32.xlu0 %v208, 16
    %v243 = vpop.permute.xlu0 %242
    %244 = vrot.lane.b32.xlu0 %v209, 16
    %v245 = vpop.permute.xlu0 %244
    %246 = vrot.lane.b32.xlu0 %v210, 16
    %v247 = vpop.permute.xlu0 %246
    %vm248 = vcmp.lt.s32.totalorder %v220, 16
    %v249 = vsel %vm248, %v245, %v247
    %v250 = vsel %vm248, %v243, %v245
    %v251 = vsel %vm248, %v241, %v243
    %v252 = vsel %vm248, %v247, %v241
    %s253 = scalar_lea.vmem %s4, 4
    %v254 = vld [vmem:[%s253] sm:$0xf]
    %v256 = vperm.slane %v254, 0
    %v257 = vperm.slane %v254, 1
    %v258 = vperm.slane %v254, 2
    %v259 = vperm.slane %v254, 3
    %v264 = vmul.f32 %v252, %v256
    %v265 = vmul.f32 %v251, %v257
    %v266 = vmul.f32 %v250, %v258
    %v267 = vmul.f32 %v249, %v259
    %268 = vrot.lane.b32.xlu0 %v207, 15
    %v269 = vpop.permute.xlu0 %268
    %270 = vrot.lane.b32.xlu0 %v208, 15
    %v271 = vpop.permute.xlu0 %270
    %272 = vrot.lane.b32.xlu0 %v209, 15
    %v273 = vpop.permute.xlu0 %272
    %274 = vrot.lane.b32.xlu0 %v210, 15
    %v275 = vpop.permute.xlu0 %274
    %vm276 = vcmp.lt.s32.totalorder %v220, 15
    %v277 = vsel %vm276, %v273, %v275
    %v278 = vsel %vm276, %v271, %v273
    %v279 = vsel %vm276, %v269, %v271
    %v280 = vsel %vm276, %v275, %v269
    %s281 = scalar_lea.vmem %s4, 8
    %v282 = vld [vmem:[%s281] sm:$0xf]
    %v284 = vperm.slane %v282, 0
    %v285 = vperm.slane %v282, 1
    %v286 = vperm.slane %v282, 2
    %v287 = vperm.slane %v282, 3
    %v292 = vmul.f32 %v280, %v284
    %v293 = vmul.f32 %v279, %v285
    %v294 = vmul.f32 %v278, %v286
    %v295 = vmul.f32 %v277, %v287
    %296 = vrot.lane.b32.xlu0 %v207, 1
    %v297 = vpop.permute.xlu0 %296
    %298 = vrot.lane.b32.xlu0 %v208, 1
    %v299 = vpop.permute.xlu0 %298
    %300 = vrot.lane.b32.xlu0 %v209, 1
    %v301 = vpop.permute.xlu0 %300
    %302 = vrot.lane.b32.xlu0 %v210, 1
    %v303 = vpop.permute.xlu0 %302
    %vm304 = vcmp.lt.s32.totalorder %v220, 1
    %v305 = vsel %vm304, %v301, %v303
    %v306 = vsel %vm304, %v299, %v301
    %v307 = vsel %vm304, %v297, %v299
    %v308 = vsel %vm304, %v303, %v297
    %s309 = scalar_lea.vmem %s4, 12
    %v310 = vld [vmem:[%s309] sm:$0xf]
    %v312 = vperm.slane %v310, 0
    %v313 = vperm.slane %v310, 1
    %v314 = vperm.slane %v310, 2
    %v315 = vperm.slane %v310, 3
    %v320 = vmul.f32 %v308, %v312
    %v321 = vmul.f32 %v307, %v313
    %v322 = vmul.f32 %v306, %v314
    %v323 = vmul.f32 %v305, %v315
    %s324 = scalar_lea.vmem %s4, 16
    %v325 = vld [vmem:[%s324] sm:$0xf]
    %v327 = vperm.slane %v325, 0
    %v328 = vperm.slane %v325, 1
    %v329 = vperm.slane %v325, 2
    %v330 = vperm.slane %v325, 3
    %v335 = vmul.f32 %v207, %v327
    %v336 = vmul.f32 %v208, %v328
    %v337 = vmul.f32 %v209, %v329
    %v338 = vmul.f32 %v210, %v330
    %339 = vrot.lane.b32.xlu0 %v207, 127
    %v340 = vpop.permute.xlu0 %339
    %341 = vrot.lane.b32.xlu0 %v208, 127
    %v342 = vpop.permute.xlu0 %341
    %343 = vrot.lane.b32.xlu0 %v209, 127
    %v344 = vpop.permute.xlu0 %343
    %345 = vrot.lane.b32.xlu0 %v210, 127
    %v346 = vpop.permute.xlu0 %345
    %vm347 = vcmp.lt.s32.totalorder %v220, 127
    %v348 = vsel %vm347, %v344, %v346
    %v349 = vsel %vm347, %v342, %v344
    %v350 = vsel %vm347, %v340, %v342
    %v351 = vsel %vm347, %v346, %v340
    %s352 = scalar_lea.vmem %s4, 20
    %v353 = vld [vmem:[%s352] sm:$0xf]
    %v355 = vperm.slane %v353, 0
    %v356 = vperm.slane %v353, 1
    %v357 = vperm.slane %v353, 2
    %v358 = vperm.slane %v353, 3
    %v363 = vmul.f32 %v350, %v355
    %v364 = vmul.f32 %v349, %v356
    %v365 = vmul.f32 %v348, %v357
    %v366 = vmul.f32 %v351, %v358
    %367 = vrot.lane.b32.xlu0 %v207, 113
    %v368 = vpop.permute.xlu0 %367
    %369 = vrot.lane.b32.xlu0 %v208, 113
    %v370 = vpop.permute.xlu0 %369
    %371 = vrot.lane.b32.xlu0 %v209, 113
    %v372 = vpop.permute.xlu0 %371
    %373 = vrot.lane.b32.xlu0 %v210, 113
    %v374 = vpop.permute.xlu0 %373
    %vm375 = vcmp.lt.s32.totalorder %v220, 113
    %v376 = vsel %vm375, %v372, %v374
    %v377 = vsel %vm375, %v370, %v372
    %v378 = vsel %vm375, %v368, %v370
    %v379 = vsel %vm375, %v374, %v368
    %s380 = scalar_lea.vmem %s4, 24
    %v381 = vld [vmem:[%s380] sm:$0xf]
    %v383 = vperm.slane %v381, 0
    %v384 = vperm.slane %v381, 1
    %v385 = vperm.slane %v381, 2
    %v386 = vperm.slane %v381, 3
    %v391 = vmul.f32 %v378, %v383
    %v392 = vmul.f32 %v377, %v384
    %v393 = vmul.f32 %v376, %v385
    %v394 = vmul.f32 %v379, %v386
    %395 = vrot.lane.b32.xlu0 %v207, 112
    %v396 = vpop.permute.xlu0 %395
    %397 = vrot.lane.b32.xlu0 %v208, 112
    %v398 = vpop.permute.xlu0 %397
    %399 = vrot.lane.b32.xlu0 %v209, 112
    %v400 = vpop.permute.xlu0 %399
    %401 = vrot.lane.b32.xlu0 %v210, 112
    %v402 = vpop.permute.xlu0 %401
    %vm403 = vcmp.lt.s32.totalorder %v220, 112
    %v404 = vsel %vm403, %v400, %v402
    %v405 = vsel %vm403, %v398, %v400
    %v406 = vsel %vm403, %v396, %v398
    %v407 = vsel %vm403, %v402, %v396
    %s408 = scalar_lea.vmem %s4, 28
    %v409 = vld [vmem:[%s408] sm:$0xf]
    %v411 = vperm.slane %v409, 0
    %v412 = vperm.slane %v409, 1
    %v413 = vperm.slane %v409, 2
    %v414 = vperm.slane %v409, 3
    %v419 = vmul.f32 %v406, %v411
    %v420 = vmul.f32 %v405, %v412
    %v421 = vmul.f32 %v404, %v413
    %v422 = vmul.f32 %v407, %v414
    %423 = vrot.lane.b32.xlu0 %v207, 111
    %v424 = vpop.permute.xlu0 %423
    %425 = vrot.lane.b32.xlu0 %v208, 111
    %v426 = vpop.permute.xlu0 %425
    %427 = vrot.lane.b32.xlu0 %v209, 111
    %v428 = vpop.permute.xlu0 %427
    %429 = vrot.lane.b32.xlu0 %v210, 111
    %v430 = vpop.permute.xlu0 %429
    %vm431 = vcmp.lt.s32.totalorder %v220, 111
    %v432 = vsel %vm431, %v428, %v430
    %v433 = vsel %vm431, %v426, %v428
    %v434 = vsel %vm431, %v424, %v426
    %v435 = vsel %vm431, %v430, %v424
    %s436 = scalar_lea.vmem %s4, 32
    %v437 = vld [vmem:[%s436] sm:$0xf]
    %v439 = vperm.slane %v437, 0
    %v440 = vperm.slane %v437, 1
    %v441 = vperm.slane %v437, 2
    %v442 = vperm.slane %v437, 3
    %v447 = vmul.f32 %v434, %v439
    %v448 = vmul.f32 %v433, %v440
    %v449 = vmul.f32 %v432, %v441
    %v450 = vmul.f32 %v435, %v442
    %v451 = vld [vmem:[%s2] sm:$0xff]
    %vm452 = vcmask 588800
    %v454 = vsel %vm452, %v451, 0
    %456 = vmatpush.msra.mxu0 0.0
    %457 = vmatpush.msra.mxu0 0.0
    %458 = vmatpush.msra.mxu0 0.0
    %459 = vmatpush.msra.mxu0 0.0
    %460 = vmatpush.msra.mxu0 0.0
    %461 = vmatpush.msra.mxu0 0.0
    %462 = vmatpush.msra.mxu0 0.0
    %463 = vmatpush.msra.mxu0 %v447
    %464 = vmatpush.msra.mxu0 %v419
    %465 = vmatpush.msra.mxu0 %v391
    %466 = vmatpush.msra.mxu0 %v363
    %467 = vmatpush.msra.mxu0 %v335
    %468 = vmatpush.msra.mxu0 %v320
    %469 = vmatpush.msra.mxu0 %v292
    %470 = vmatpush.msra.mxu0 %v264
    %471 = vmatpush.msra.mxu0 %v236
    %472 = vmatmul.f32.gmra.mxu0 %v454
    %v473 = vpop.f32.mrf.mxu0
    %v474 = vadd.f32 0.0, %v473
    %475 = vdwg.mxu0
    %476 = vmatpush.msra.mxu0 0.0
    %477 = vmatpush.msra.mxu0 0.0
    %478 = vmatpush.msra.mxu0 0.0
    %479 = vmatpush.msra.mxu0 0.0
    %480 = vmatpush.msra.mxu0 0.0
    %481 = vmatpush.msra.mxu0 0.0
    %482 = vmatpush.msra.mxu0 0.0
    %483 = vmatpush.msra.mxu0 %v448
    %484 = vmatpush.msra.mxu0 %v420
    %485 = vmatpush.msra.mxu0 %v392
    %486 = vmatpush.msra.mxu0 %v364
    %487 = vmatpush.msra.mxu0 %v336
    %488 = vmatpush.msra.mxu0 %v321
    %489 = vmatpush.msra.mxu0 %v293
    %490 = vmatpush.msra.mxu0 %v265
    %491 = vmatpush.msra.mxu0 %v237
    %492 = vmatmul.f32.gmra.mxu0 %v454
    %v493 = vpop.f32.mrf.mxu0
    %v494 = vadd.f32 0.0, %v493
    %495 = vdwg.mxu0
    %496 = vmatpush.msra.mxu0 0.0
    %497 = vmatpush.msra.mxu0 0.0
    %498 = vmatpush.msra.mxu0 0.0
    %499 = vmatpush.msra.mxu0 0.0
    %500 = vmatpush.msra.mxu0 0.0
    %501 = vmatpush.msra.mxu0 0.0
    %502 = vmatpush.msra.mxu0 0.0
    %503 = vmatpush.msra.mxu0 %v449
    %504 = vmatpush.msra.mxu0 %v421
    %505 = vmatpush.msra.mxu0 %v393
    %506 = vmatpush.msra.mxu0 %v365
    %507 = vmatpush.msra.mxu0 %v337
    %508 = vmatpush.msra.mxu0 %v322
    %509 = vmatpush.msra.mxu0 %v294
    %510 = vmatpush.msra.mxu0 %v266
    %511 = vmatpush.msra.mxu0 %v238
    %512 = vmatmul.f32.gmra.mxu0 %v454
    %v513 = vpop.f32.mrf.mxu0
    %v514 = vadd.f32 0.0, %v513
    %515 = vdwg.mxu0
    %516 = vmatpush.msra.mxu0 0.0
    %517 = vmatpush.msra.mxu0 0.0
    %518 = vmatpush.msra.mxu0 0.0
    %519 = vmatpush.msra.mxu0 0.0
    %520 = vmatpush.msra.mxu0 0.0
    %521 = vmatpush.msra.mxu0 0.0
    %522 = vmatpush.msra.mxu0 0.0
    %523 = vmatpush.msra.mxu0 %v450
    %524 = vmatpush.msra.mxu0 %v422
    %525 = vmatpush.msra.mxu0 %v394
    %526 = vmatpush.msra.mxu0 %v366
    %527 = vmatpush.msra.mxu0 %v338
    %528 = vmatpush.msra.mxu0 %v323
    %529 = vmatpush.msra.mxu0 %v295
    %530 = vmatpush.msra.mxu0 %v267
    %531 = vmatpush.msra.mxu0 %v239
    %532 = vmatmul.f32.gmra.mxu0 %v454
    %v533 = vpop.f32.mrf.mxu0
    %v534 = vadd.f32 0.0, %v533
    %535 = vdwg.mxu0
    %v536 = vld [vmem:[#allocation2] sm:$0xff]
    %v537 = vld [vmem:[#allocation2 + $0x8] sm:$0xff]
    %v538 = vld [vmem:[#allocation2 + $0x10] sm:$0xff]
    %v539 = vld [vmem:[#allocation2 + $0x18] sm:$0xff]
    %v540 = vld [vmem:[#allocation2 + $0x20] sm:$0xff]
    %v541 = vld [vmem:[#allocation2 + $0x28] sm:$0xff]
    %v542 = vld [vmem:[#allocation2 + $0x30] sm:$0xff]
    %v543 = vld [vmem:[#allocation2 + $0x38] sm:$0xff]
    %v544 = vld [vmem:[#allocation2 + $0x40] sm:$0xff]
    %v545 = vld [vmem:[#allocation2 + $0x48] sm:$0xff]
    %v546 = vld [vmem:[#allocation2 + $0x50] sm:$0xff]
    %v547 = vld [vmem:[#allocation2 + $0x58] sm:$0xff]
    %v548 = vld [vmem:[#allocation2 + $0x60] sm:$0xff]
    %v549 = vld [vmem:[#allocation2 + $0x68] sm:$0xff]
    %v550 = vld [vmem:[#allocation2 + $0x70] sm:$0xff]
    %v551 = vld [vmem:[#allocation2 + $0x78] sm:$0xff]
    %v552 = vld [vmem:[#allocation2 + $0x80] sm:$0xff]
    %v553 = vld [vmem:[#allocation2 + $0x88] sm:$0xff]
    %v554 = vld [vmem:[#allocation2 + $0x90] sm:$0xff]
    %v555 = vld [vmem:[#allocation2 + $0x98] sm:$0xff]
    %v556 = vld [vmem:[#allocation2 + $0xa0] sm:$0xff]
    %v557 = vld [vmem:[#allocation2 + $0xa8] sm:$0xff]
    %v558 = vld [vmem:[#allocation2 + $0xb0] sm:$0xff]
    %v559 = vld [vmem:[#allocation2 + $0xb8] sm:$0xff]
    %v560 = vld [vmem:[#allocation2 + $0xc0] sm:$0xff]
    %v561 = vld [vmem:[#allocation2 + $0xc8] sm:$0xff]
    %v562 = vld [vmem:[#allocation2 + $0xd0] sm:$0xff]
    %v563 = vld [vmem:[#allocation2 + $0xd8] sm:$0xff]
    %v564 = vld [vmem:[#allocation2 + $0xe0] sm:$0xff]
    %v565 = vld [vmem:[#allocation2 + $0xe8] sm:$0xff]
    %v566 = vld [vmem:[#allocation2 + $0xf0] sm:$0xff]
    %v567 = vld [vmem:[#allocation2 + $0xf8] sm:$0xff]
    %v568 = vld [vmem:[#allocation2 + $0x100] sm:$0xff]
    %v569 = vld [vmem:[#allocation2 + $0x108] sm:$0xff]
    %v570 = vld [vmem:[#allocation2 + $0x110] sm:$0xff]
    %v571 = vld [vmem:[#allocation2 + $0x118] sm:$0xff]
    %v572 = vld [vmem:[#allocation2 + $0x120] sm:$0xff]
    %v573 = vld [vmem:[#allocation2 + $0x128] sm:$0xff]
    %v574 = vld [vmem:[#allocation2 + $0x130] sm:$0xff]
    %v575 = vld [vmem:[#allocation2 + $0x138] sm:$0xff]
    %v576 = vld [vmem:[#allocation2 + $0x140] sm:$0xff]
    %v577 = vld [vmem:[#allocation2 + $0x148] sm:$0xff]
    %v578 = vld [vmem:[#allocation2 + $0x150] sm:$0xff]
    %v579 = vld [vmem:[#allocation2 + $0x158] sm:$0xff]
    %v580 = vld [vmem:[#allocation2 + $0x160] sm:$0xff]
    %v581 = vld [vmem:[#allocation2 + $0x168] sm:$0xff]
    %v582 = vld [vmem:[#allocation2 + $0x170] sm:$0xff]
    %v583 = vld [vmem:[#allocation2 + $0x178] sm:$0xff]
    %v584 = vld [vmem:[#allocation2 + $0x180] sm:$0xff]
    %v585 = vld [vmem:[#allocation2 + $0x188] sm:$0xff]
    %v586 = vld [vmem:[#allocation2 + $0x190] sm:$0xff]
    %v587 = vld [vmem:[#allocation2 + $0x198] sm:$0xff]
    %v588 = vld [vmem:[#allocation2 + $0x1a0] sm:$0xff]
    %v589 = vld [vmem:[#allocation2 + $0x1a8] sm:$0xff]
    %v590 = vld [vmem:[#allocation2 + $0x1b0] sm:$0xff]
    %v591 = vld [vmem:[#allocation2 + $0x1b8] sm:$0xff]
    %v592 = vld [vmem:[#allocation2 + $0x1c0] sm:$0xff]
    %v593 = vld [vmem:[#allocation2 + $0x1c8] sm:$0xff]
    %v594 = vld [vmem:[#allocation2 + $0x1d0] sm:$0xff]
    %v595 = vld [vmem:[#allocation2 + $0x1d8] sm:$0xff]
    %v596 = vld [vmem:[#allocation2 + $0x1e0] sm:$0xff]
    %v597 = vld [vmem:[#allocation2 + $0x1e8] sm:$0xff]
    %v598 = vld [vmem:[#allocation2 + $0x1f0] sm:$0xff]
    %v599 = vld [vmem:[#allocation2 + $0x1f8] sm:$0xff]
    %600 = vmatpush.msra.mxu0 %v551
    %601 = vmatpush.msra.mxu0 %v550
    %602 = vmatpush.msra.mxu0 %v549
    %603 = vmatpush.msra.mxu0 %v548
    %604 = vmatpush.msra.mxu0 %v547
    %605 = vmatpush.msra.mxu0 %v546
    %606 = vmatpush.msra.mxu0 %v545
    %607 = vmatpush.msra.mxu0 %v544
    %608 = vmatpush.msra.mxu0 %v543
    %609 = vmatpush.msra.mxu0 %v542
    %610 = vmatpush.msra.mxu0 %v541
    %611 = vmatpush.msra.mxu0 %v540
    %612 = vmatpush.msra.mxu0 %v539
    %613 = vmatpush.msra.mxu0 %v538
    %614 = vmatpush.msra.mxu0 %v537
    %615 = vmatpush.msra.mxu0 %v536
    %616 = vmatmul.f32.gmra.mxu0 %v474
    %v617 = vpop.f32.mrf.mxu0
    %v618 = vadd.f32 0.0, %v617
    %619 = vdwg.mxu0
    %620 = vmatpush.msra.mxu0 %v567
    %621 = vmatpush.msra.mxu0 %v566
    %622 = vmatpush.msra.mxu0 %v565
    %623 = vmatpush.msra.mxu0 %v564
    %624 = vmatpush.msra.mxu0 %v563
    %625 = vmatpush.msra.mxu0 %v562
    %626 = vmatpush.msra.mxu0 %v561
    %627 = vmatpush.msra.mxu0 %v560
    %628 = vmatpush.msra.mxu0 %v559
    %629 = vmatpush.msra.mxu0 %v558
    %630 = vmatpush.msra.mxu0 %v557
    %631 = vmatpush.msra.mxu0 %v556
    %632 = vmatpush.msra.mxu0 %v555
    %633 = vmatpush.msra.mxu0 %v554
    %634 = vmatpush.msra.mxu0 %v553
    %635 = vmatpush.msra.mxu0 %v552
    %636 = vmatmul.f32.gmra.mxu0 %v494
    %v637 = vpop.f32.mrf.mxu0
    %v638 = vadd.f32 %v618, %v637
    %639 = vdwg.mxu0
    %640 = vmatpush.msra.mxu0 %v583
    %641 = vmatpush.msra.mxu0 %v582
    %642 = vmatpush.msra.mxu0 %v581
    %643 = vmatpush.msra.mxu0 %v580
    %644 = vmatpush.msra.mxu0 %v579
    %645 = vmatpush.msra.mxu0 %v578
    %646 = vmatpush.msra.mxu0 %v577
    %647 = vmatpush.msra.mxu0 %v576
    %648 = vmatpush.msra.mxu0 %v575
    %649 = vmatpush.msra.mxu0 %v574
    %650 = vmatpush.msra.mxu0 %v573
    %651 = vmatpush.msra.mxu0 %v572
    %652 = vmatpush.msra.mxu0 %v571
    %653 = vmatpush.msra.mxu0 %v570
    %654 = vmatpush.msra.mxu0 %v569
    %655 = vmatpush.msra.mxu0 %v568
    %656 = vmatmul.f32.gmra.mxu0 %v514
    %v657 = vpop.f32.mrf.mxu0
    %v658 = vadd.f32 %v638, %v657
    %659 = vdwg.mxu0
    %660 = vmatpush.msra.mxu0 %v599
    %661 = vmatpush.msra.mxu0 %v598
    %662 = vmatpush.msra.mxu0 %v597
    %663 = vmatpush.msra.mxu0 %v596
    %664 = vmatpush.msra.mxu0 %v595
    %665 = vmatpush.msra.mxu0 %v594
    %666 = vmatpush.msra.mxu0 %v593
    %667 = vmatpush.msra.mxu0 %v592
    %668 = vmatpush.msra.mxu0 %v591
    %669 = vmatpush.msra.mxu0 %v590
    %670 = vmatpush.msra.mxu0 %v589
    %671 = vmatpush.msra.mxu0 %v588
    %672 = vmatpush.msra.mxu0 %v587
    %673 = vmatpush.msra.mxu0 %v586
    %674 = vmatpush.msra.mxu0 %v585
    %675 = vmatpush.msra.mxu0 %v584
    %676 = vmatmul.f32.gmra.mxu0 %v534
    %v677 = vpop.f32.mrf.mxu0
    %v678 = vadd.f32 %v658, %v677
    %679 = vdwg.mxu0
    %v680 = vld [vmem:[%s6] sm:$0xff]
    %681 = vadd.xlane.f32.xlu0 %v678
    %v682 = vpop.xlane.xlu0 %681
    %v683 = vrcp.pop 128.0
    %v684 = vmul.f32 128.0, %v683
    %v685 = vsub.f32 1.0, %v684
    %v686 = vmul.f32 %v683, %v685
    %v687 = vadd.f32 %v683, %v686
    %vm688 = vweird.f32 %v683
    %v689 = vsel %vm688, %v683, %v687
    %v690 = vmul.f32 %v682, %v689
    %v691 = vsub.f32 %v678, %v690
    %v692 = vmul.f32 %v691, %v691
    %693 = vadd.xlane.f32.xlu0 %v692
    %v694 = vpop.xlane.xlu0 %693
    %v695 = vmul.f32 %v694, %v689
    %v696 = vadd.f32 %v695, 1e-05
    %v697 = vrsqrt.pop %v696
    %v698 = vmul.f32 %v697, %v696
    %v699 = vmul.f32 %v698, %v697
    %v700 = vmul.f32 0.5, %v699
    %v701 = vsub.f32 1.5, %v700
    %v702 = vmul.f32 %v697, %v701
    %vm703 = vweird.f32 %v696
    %vm704 = vweird.f32 %v697
    %vm705 = vmor %vm703, %vm704
    %v706 = vsel %vm705, %v697, %v702
    %v707 = vmul.f32 %v680, %v706
    %709 = vset.pattern.permute.xlu0 0
    %710 = vperm.xlu0 %709, %v707
    %v711 = vpop.permute.xlu0 %710
    %v713 = vmul.f32 %v678, %v711
    %v714 = vmul.f32 %v690, %v707
    %716 = vrot.lane.b32.xlu0 %v714, 1
    %v717 = vpop.permute.xlu0 %716
    %v719 = vsub.f32 %v680, %v717
    %721 = vset.pattern.permute.xlu0 1
    %722 = vperm.xlu0 %721, %v719
    %v723 = vpop.permute.xlu0 %722
    %v725 = vadd.f32 %v713, %v723
    %v726 = vmax.f32 %v725, 0.0
    %v727 = vld [vmem:[%s3] sm:$0xff]
    %v728 = vld [vmem:[%s3 + $0x8] sm:$0xff]
    %v730 = vsel %vm59, %v727, 0
    %v733 = vsel %vm59, %v728, 0
    %735 = vmatpush.msra.mxu0 0.0
    %736 = vmatpush.msra.mxu0 0.0
    %737 = vmatpush.msra.mxu0 0.0
    %738 = vmatpush.msra.mxu0 0.0
    %739 = vmatpush.msra.mxu0 0.0
    %740 = vmatpush.msra.mxu0 0.0
    %741 = vmatpush.msra.mxu0 0.0
    %742 = vmatpush.msra.mxu0 0.0
    %743 = vmatpush.msra.mxu0 0.0
    %744 = vmatpush.msra.mxu0 0.0
    %745 = vmatpush.msra.mxu0 0.0
    %746 = vmatpush.msra.mxu0 0.0
    %747 = vmatpush.msra.mxu0 0.0
    %748 = vmatpush.msra.mxu0 0.0
    %749 = vmatpush.msra.mxu0 0.0
    %750 = vmatpush.msra.mxu0 %v726
    %751 = vmatmul.f32.gmra.mxu0 %v730
    %v752 = vpop.f32.mrf.mxu0
    %v753 = vadd.f32 0.0, %v752
    %754 = vmatmul.f32.gmra.mxu0 %v733
    %v755 = vpop.f32.mrf.mxu0
    %v756 = vadd.f32 0.0, %v755
    %757 = vdwg.mxu0
    %v758 = vld [vmem:[%s7] sm:$0xff]
    %v759 = vld [vmem:[%s7 + $0x8] sm:$0xff]
    %760 = vadd.xlane.f32.xlu0 %v753
    %v761 = vpop.xlane.xlu0 %760
    %762 = vadd.xlane.f32.xlu0 %v756
    %v763 = vpop.xlane.xlu0 %762
    %v764 = vmul.f32 %v761, %v689
    %v765 = vmul.f32 %v763, %v689
    %v766 = vsub.f32 %v753, %v764
    %v767 = vsub.f32 %v756, %v765
    %v768 = vmul.f32 %v766, %v766
    %v769 = vmul.f32 %v767, %v767
    %770 = vadd.xlane.f32.xlu0 %v768
    %v771 = vpop.xlane.xlu0 %770
    %772 = vadd.xlane.f32.xlu0 %v769
    %v773 = vpop.xlane.xlu0 %772
    %v774 = vmul.f32 %v771, %v689
    %v775 = vmul.f32 %v773, %v689
    %v776 = vadd.f32 %v774, 1e-05
    %v777 = vadd.f32 %v775, 1e-05
    %v778 = vrsqrt.pop %v776
    %v779 = vmul.f32 %v778, %v776
    %v780 = vmul.f32 %v779, %v778
    %v781 = vmul.f32 0.5, %v780
    %v782 = vsub.f32 1.5, %v781
    %v783 = vmul.f32 %v778, %v782
    %vm784 = vweird.f32 %v776
    %vm785 = vweird.f32 %v778
    %vm786 = vmor %vm784, %vm785
    %v787 = vsel %vm786, %v778, %v783
    %v788 = vrsqrt.pop %v777
    %v789 = vmul.f32 %v788, %v777
    %v790 = vmul.f32 %v789, %v788
    %v791 = vmul.f32 0.5, %v790
    %v792 = vsub.f32 1.5, %v791
    %v793 = vmul.f32 %v788, %v792
    %vm794 = vweird.f32 %v777
    %vm795 = vweird.f32 %v788
    %vm796 = vmor %vm794, %vm795
    %v797 = vsel %vm796, %v788, %v793
    %v798 = vmul.f32 %v758, %v787
    %v799 = vmul.f32 %v759, %v797
    %801 = vset.pattern.permute.xlu0 0
    %802 = vperm.xlu0 %801, %v798
    %v803 = vpop.permute.xlu0 %802
    %806 = vset.pattern.permute.xlu0 0
    %807 = vperm.xlu0 %806, %v799
    %v808 = vpop.permute.xlu0 %807
    %v810 = vmul.f32 %v753, %v803
    %v811 = vmul.f32 %v756, %v808
    %v812 = vmul.f32 %v764, %v798
    %v813 = vmul.f32 %v765, %v799
    %816 = vrot.lane.b32.xlu0 %v812, 1
    %v817 = vpop.permute.xlu0 %816
    %818 = vrot.lane.b32.xlu0 %v813, 1
    %v819 = vpop.permute.xlu0 %818
    %v822 = vsub.f32 %v758, %v817
    %v823 = vsub.f32 %v759, %v819
    %825 = vset.pattern.permute.xlu0 1
    %826 = vperm.xlu0 %825, %v822
    %v827 = vpop.permute.xlu0 %826
    %830 = vset.pattern.permute.xlu0 1
    %831 = vperm.xlu0 %830, %v823
    %v832 = vpop.permute.xlu0 %831
    %v834 = vadd.f32 %v810, %v827
    %v835 = vadd.f32 %v811, %v832
    %836 = vmatpush.msra.mxu0 %v551
    %837 = vmatpush.msra.mxu0 %v550
    %838 = vmatpush.msra.mxu0 %v549
    %839 = vmatpush.msra.mxu0 %v548
    %840 = vmatpush.msra.mxu0 %v547
    %841 = vmatpush.msra.mxu0 %v546
    %842 = vmatpush.msra.mxu0 %v545
    %843 = vmatpush.msra.mxu0 %v544
    %844 = vmatpush.msra.mxu0 %v543
    %845 = vmatpush.msra.mxu0 %v542
    %846 = vmatpush.msra.mxu0 %v541
    %847 = vmatpush.msra.mxu0 %v540
    %848 = vmatpush.msra.mxu0 %v539
    %849 = vmatpush.msra.mxu0 %v538
    %850 = vmatpush.msra.mxu0 %v537
    %851 = vmatpush.msra.mxu0 %v536
    %852 = vmatmul.f32.gmra.mxu0 %v54
    %v853 = vpop.f32.mrf.mxu0
    %v854 = vadd.f32 0.0, %v853
    %855 = vdwg.mxu0
    %856 = vmatpush.msra.mxu0 %v567
    %857 = vmatpush.msra.mxu0 %v566
    %858 = vmatpush.msra.mxu0 %v565
    %859 = vmatpush.msra.mxu0 %v564
    %860 = vmatpush.msra.mxu0 %v563
    %861 = vmatpush.msra.mxu0 %v562
    %862 = vmatpush.msra.mxu0 %v561
    %863 = vmatpush.msra.mxu0 %v560
    %864 = vmatpush.msra.mxu0 %v559
    %865 = vmatpush.msra.mxu0 %v558
    %866 = vmatpush.msra.mxu0 %v557
    %867 = vmatpush.msra.mxu0 %v556
    %868 = vmatpush.msra.mxu0 %v555
    %869 = vmatpush.msra.mxu0 %v554
    %870 = vmatpush.msra.mxu0 %v553
    %871 = vmatpush.msra.mxu0 %v552
    %872 = vmatmul.f32.gmra.mxu0 %v55
    %v873 = vpop.f32.mrf.mxu0
    %v874 = vadd.f32 %v854, %v873
    %875 = vdwg.mxu0
    %876 = vmatpush.msra.mxu0 %v583
    %877 = vmatpush.msra.mxu0 %v582
    %878 = vmatpush.msra.mxu0 %v581
    %879 = vmatpush.msra.mxu0 %v580
    %880 = vmatpush.msra.mxu0 %v579
    %881 = vmatpush.msra.mxu0 %v578
    %882 = vmatpush.msra.mxu0 %v577
    %883 = vmatpush.msra.mxu0 %v576
    %884 = vmatpush.msra.mxu0 %v575
    %885 = vmatpush.msra.mxu0 %v574
    %886 = vmatpush.msra.mxu0 %v573
    %887 = vmatpush.msra.mxu0 %v572
    %888 = vmatpush.msra.mxu0 %v571
    %889 = vmatpush.msra.mxu0 %v570
    %890 = vmatpush.msra.mxu0 %v569
    %891 = vmatpush.msra.mxu0 %v568
    %892 = vmatmul.f32.gmra.mxu0 %v56
    %v893 = vpop.f32.mrf.mxu0
    %v894 = vadd.f32 %v874, %v893
    %895 = vdwg.mxu0
    %896 = vmatpush.msra.mxu0 %v599
    %897 = vmatpush.msra.mxu0 %v598
    %898 = vmatpush.msra.mxu0 %v597
    %899 = vmatpush.msra.mxu0 %v596
    %900 = vmatpush.msra.mxu0 %v595
    %901 = vmatpush.msra.mxu0 %v594
    %902 = vmatpush.msra.mxu0 %v593
    %903 = vmatpush.msra.mxu0 %v592
    %904 = vmatpush.msra.mxu0 %v591
    %905 = vmatpush.msra.mxu0 %v590
    %906 = vmatpush.msra.mxu0 %v589
    %907 = vmatpush.msra.mxu0 %v588
    %908 = vmatpush.msra.mxu0 %v587
    %909 = vmatpush.msra.mxu0 %v586
    %910 = vmatpush.msra.mxu0 %v585
    %911 = vmatpush.msra.mxu0 %v584
    %912 = vmatmul.f32.gmra.mxu0 %v57
    %v913 = vpop.f32.mrf.mxu0
    %v914 = vadd.f32 %v894, %v913
    %915 = vdwg.mxu0
    %v916 = vld [vmem:[%s9] sm:$0xff]
    %v917 = vld [vmem:[%s9 + $0x8] sm:$0xff]
    %v919 = vsel %vm59, %v916, 0
    %v922 = vsel %vm59, %v917, 0
    %924 = vmatpush.msra.mxu0 0.0
    %925 = vmatpush.msra.mxu0 0.0
    %926 = vmatpush.msra.mxu0 0.0
    %927 = vmatpush.msra.mxu0 0.0
    %928 = vmatpush.msra.mxu0 0.0
    %929 = vmatpush.msra.mxu0 0.0
    %930 = vmatpush.msra.mxu0 0.0
    %931 = vmatpush.msra.mxu0 0.0
    %932 = vmatpush.msra.mxu0 0.0
    %933 = vmatpush.msra.mxu0 0.0
    %934 = vmatpush.msra.mxu0 0.0
    %935 = vmatpush.msra.mxu0 0.0
    %936 = vmatpush.msra.mxu0 0.0
    %937 = vmatpush.msra.mxu0 0.0
    %938 = vmatpush.msra.mxu0 0.0
    %939 = vmatpush.msra.mxu0 %v914
    %940 = vmatmul.f32.gmra.mxu0 %v919
    %v941 = vpop.f32.mrf.mxu0
    %v942 = vadd.f32 0.0, %v941
    %943 = vmatmul.f32.gmra.mxu0 %v922
    %v944 = vpop.f32.mrf.mxu0
    %v945 = vadd.f32 0.0, %v944
    %946 = vdwg.mxu0
    %v947 = vld [vmem:[%s10] sm:$0xff]
    %v948 = vld [vmem:[%s10 + $0x8] sm:$0xff]
    %949 = vadd.xlane.f32.xlu0 %v942
    %v950 = vpop.xlane.xlu0 %949
    %951 = vadd.xlane.f32.xlu0 %v945
    %v952 = vpop.xlane.xlu0 %951
    %v953 = vmul.f32 %v950, %v689
    %v954 = vmul.f32 %v952, %v689
    %v955 = vsub.f32 %v942, %v953
    %v956 = vsub.f32 %v945, %v954
    %v957 = vmul.f32 %v955, %v955
    %v958 = vmul.f32 %v956, %v956
    %959 = vadd.xlane.f32.xlu0 %v957
    %v960 = vpop.xlane.xlu0 %959
    %961 = vadd.xlane.f32.xlu0 %v958
    %v962 = vpop.xlane.xlu0 %961
    %v963 = vmul.f32 %v960, %v689
    %v964 = vmul.f32 %v962, %v689
    %v965 = vadd.f32 %v963, 1e-05
    %v966 = vadd.f32 %v964, 1e-05
    %v967 = vrsqrt.pop %v965
    %v968 = vmul.f32 %v967, %v965
    %v969 = vmul.f32 %v968, %v967
    %v970 = vmul.f32 0.5, %v969
    %v971 = vsub.f32 1.5, %v970
    %v972 = vmul.f32 %v967, %v971
    %vm973 = vweird.f32 %v965
    %vm974 = vweird.f32 %v967
    %vm975 = vmor %vm973, %vm974
    %v976 = vsel %vm975, %v967, %v972
    %v977 = vrsqrt.pop %v966
    %v978 = vmul.f32 %v977, %v966
    %v979 = vmul.f32 %v978, %v977
    %v980 = vmul.f32 0.5, %v979
    %v981 = vsub.f32 1.5, %v980
    %v982 = vmul.f32 %v977, %v981
    %vm983 = vweird.f32 %v966
    %vm984 = vweird.f32 %v977
    %vm985 = vmor %vm983, %vm984
    %v986 = vsel %vm985, %v977, %v982
    %v987 = vmul.f32 %v947, %v976
    %v988 = vmul.f32 %v948, %v986
    %990 = vset.pattern.permute.xlu0 0
    %991 = vperm.xlu0 %990, %v987
    %v992 = vpop.permute.xlu0 %991
    %995 = vset.pattern.permute.xlu0 0
    %996 = vperm.xlu0 %995, %v988
    %v997 = vpop.permute.xlu0 %996
    %v999 = vmul.f32 %v942, %v992
    %v1000 = vmul.f32 %v945, %v997
    %v1001 = vmul.f32 %v953, %v987
    %v1002 = vmul.f32 %v954, %v988
    %1005 = vrot.lane.b32.xlu0 %v1001, 1
    %v1006 = vpop.permute.xlu0 %1005
    %1007 = vrot.lane.b32.xlu0 %v1002, 1
    %v1008 = vpop.permute.xlu0 %1007
    %v1011 = vsub.f32 %v947, %v1006
    %v1012 = vsub.f32 %v948, %v1008
    %1014 = vset.pattern.permute.xlu0 1
    %1015 = vperm.xlu0 %1014, %v1011
    %v1016 = vpop.permute.xlu0 %1015
    %1019 = vset.pattern.permute.xlu0 1
    %1020 = vperm.xlu0 %1019, %v1012
    %v1021 = vpop.permute.xlu0 %1020
    %v1023 = vadd.f32 %v999, %v1016
    %v1024 = vadd.f32 %v1000, %v1021
    %v1025 = vadd.f32 %v834, %v1023
    %v1026 = vadd.f32 %v835, %v1024
    %v1027 = vmax.f32 %v1025, 0.0
    %v1028 = vmax.f32 %v1026, 0.0
    %1029 = vst [vmem:[%s11] sm:$0xff] %v1027
    %1030 = vst [vmem:[%s11 + $0x8] sm:$0xff] %v1028
    // Predicated region
    $region50: #{res_bottleneck_forward.1} parent=1 // pred_check
      _
    $region51: #{res_bottleneck_forward.1} parent=1 // pred_check_branch
      %1032 = sbr.rel (0) target = $region53
    $region52: #{res_bottleneck_forward.1} parent=1 // pred_region
      _
    $region53: #{res_bottleneck_forward.1} parent=1 // pred_fallthru
      _
    // Predicated region
    $region54: #{res_bottleneck_forward.1} parent=1 // pred_check
      _
    $region55: #{res_bottleneck_forward.1} parent=1 // pred_check_branch
      %1034 = sbr.rel (0) target = $region57
    $region56: #{res_bottleneck_forward.1} parent=1 // pred_region
      _
    $region57: #{res_bottleneck_forward.1} parent=1 // pred_fallthru
      _
    %1035 = vsyncpa [#allocation3], 1

</llo_original>
